<compile_context>
chip_gen: v6e
topology: v6e:2x2x1
jax: 0.10.0
libtpu: 0.0.40
codegen_flags: <defaults>
</compile_context>

<pallas_src>
import functools

import jax
import jax.numpy as jnp
from jax.experimental import pallas as pl
from jax.experimental.pallas import tpu as pltpu


def _focal_partial_kernel(x_ref, t_ref, out_ref, *, alpha, gamma, ignore_index):
    x = x_ref[...].astype(jnp.float32)        # (N, C, S, 128)
    t = t_ref[...]                             # (N, S, 128) int32
    n, num_classes, s, lanes = x.shape

    # Per-pixel max over the class axis (axis=1 is an outer vreg axis:
    # elementwise max across C vregs, no cross-lane shuffles).
    m = jnp.max(x, axis=1)                     # (N, S, 128)

    # Softmax denominator + x[target] via a statically-unrolled per-class
    # accumulation (no 4D iota, no one-hot temporary, no bool->f32 cast).
    denom = jnp.zeros_like(m)
    x_t = jnp.zeros_like(m)
    for c in range(num_classes):               # C is small and static
        xc = x[:, c]                           # (N, S, 128)
        denom = denom + jnp.exp(xc - m)
        x_t = x_t + jnp.where(t == c, xc, 0.0)

    ce = m + jnp.log(denom) - x_t              # per-pixel cross-entropy
    pt = jnp.exp(-ce)
    focal = alpha * (1.0 - pt) ** gamma * ce   # integer gamma -> integer_pow

    # Ignored pixels (and the ignore_index-padded tail) contribute 0 to the
    # sum but still count in the mean denominator (matches
    # cross_entropy(reduction='none') followed by .mean()).
    focal = jnp.where(t != ignore_index, focal, 0.0)

    # Vectorized partial sum: fold (N, S, 128) -> (8, 128). No in-kernel XLU
    # cross-lane reduction; the tiny final reduction happens in JAX.
    partial = jnp.sum(focal, axis=0)                               # (S, 128)
    partial = jnp.sum(partial.reshape(s // 8, 8, lanes), axis=0)   # (8, 128)
    out_ref[0] = partial


def focal_loss(inputs_nchw, targets_nhw, *, alpha=1.0, gamma=2, ignore_index=-100):
    """Pallas implementation of FocalLoss.forward (returns a f32 scalar)."""
    N, C, H, W = inputs_nchw.shape
    assert targets_nhw.shape == (N, H, W)
    HW = H * W
    LANES = 128

    # Keep gamma an integer when it is one, so the power lowers to integer_pow.
    g = float(gamma)
    gamma_static = int(g) if g.is_integer() else g

    # ---- Tile sizing ----------------------------------------------------
    itemsize = jnp.dtype(inputs_nchw.dtype).itemsize
    bytes_per_row = N * C * LANES * itemsize          # logits bytes / sublane row
    block_budget = 6 * 1024 * 1024                    # per logits block (pre-f32)
    s_cap = max(8, (block_budget // bytes_per_row) // 8 * 8)

    r = pl.cdiv(HW, LANES)                            # pixel rows needed
    r8 = pl.cdiv(r, 8) * 8                            # rounded to sublane multiple
    num_tiles = max(1, pl.cdiv(r8, s_cap))
    if num_tiles == 1 and r8 >= 16:
        num_tiles = 2                                 # keep both v7x TCs busy
    sub_tile = pl.cdiv(pl.cdiv(r8, num_tiles), 8) * 8  # balanced, multiple of 8
    r_pad = num_tiles * sub_tile                      # exact multiple of sub_tile
    hw_pad = r_pad * LANES

    # ---- Layout (NCHW-native: pure reshapes, no transpose, no f32 upcast) ----
    x = inputs_nchw.reshape(N, C, HW)
    t = targets_nhw
    if t.dtype != jnp.int32:
        t = t.astype(jnp.int32)
    t = t.reshape(N, HW)
    if hw_pad != HW:
        # Logit pad = 0.0 (exp-safe); target pad = ignore_index (contributes 0).
        x = jnp.pad(x, ((0, 0), (0, 0), (0, hw_pad - HW)))
        t = jnp.pad(t, ((0, 0), (0, hw_pad - HW)),
                    constant_values=int(ignore_index))
    x = x.reshape(N, C, r_pad, LANES)
    t = t.reshape(N, r_pad, LANES)

    kernel = functools.partial(
        _focal_partial_kernel,
        alpha=float(alpha),
        gamma=gamma_static,
        ignore_index=int(ignore_index),
    )

    partials = pl.pallas_call(
        kernel,
        out_shape=jax.ShapeDtypeStruct((num_tiles, 8, LANES), jnp.float32),
        grid=(num_tiles,),
        in_specs=[
            pl.BlockSpec((N, C, sub_tile, LANES), lambda i: (0, 0, i, 0)),
            pl.BlockSpec((N, sub_tile, LANES), lambda i: (0, i, 0)),
        ],
        out_specs=pl.BlockSpec((1, 8, LANES), lambda i: (i, 0, 0)),
        compiler_params=pltpu.CompilerParams(
            dimension_semantics=("parallel",),
            vmem_limit_bytes=48 * 1024 * 1024,
        ),
    )(x, t)

    # Tiny final reduction; mean is over ALL pixels (ignored pixels count in
    # the denominator, matching the PyTorch module).
    return jnp.sum(partials) / (N * H * W)


def _focal_loss_ref(inputs_nchw, targets_nhw, alpha=1.0, gamma=2, ignore_index=-100):
    """Pure-JAX reference mirroring the PyTorch forward."""
    logp = jax.nn.log_softmax(inputs_nchw.astype(jnp.float32), axis=1)
    t = targets_nhw.astype(jnp.int32)
    valid = t != ignore_index
    t_safe = jnp.where(valid, t, 0)
    lp_t = jnp.take_along_axis(logp, t_safe[:, None], axis=1)[:, 0]  # (N,H,W)
    ce = jnp.where(valid, -lp_t, 0.0)
    pt = jnp.exp(-ce)
    f = alpha * (1.0 - pt) ** gamma * ce
    return jnp.mean(f)


if __name__ == "__main__":
    key = jax.random.PRNGKey(0)
    k_x, k_t, k_m = jax.random.split(key, 3)

    N, C, H, W = 2, 4, 16, 16
    inputs = jax.random.normal(k_x, (N, C, H, W), dtype=jnp.float32)
    targets = jax.random.randint(k_t, (N, H, W), 0, C, dtype=jnp.int32)
    # sprinkle some ignore_index pixels (module default ignore_index=-100)
    ignore_mask = jax.random.bernoulli(k_m, p=0.1, shape=(N, H, W))
    targets = jnp.where(ignore_mask, jnp.int32(-100), targets)

    loss = focal_loss(inputs, targets, alpha=1.0, gamma=2, ignore_index=-100)
    loss = jax.block_until_ready(loss)

    ref = _focal_loss_ref(inputs, targets, alpha=1.0, gamma=2, ignore_index=-100)
    assert jnp.allclose(loss, ref, atol=1e-5, rtol=1e-5), (loss, ref)

    print("KERNEL_OK")
</pallas_src>

<mosaic_0001>
module attributes {stable_mosaic.version = 11 : i64} {
  func.func @_focal_partial_kernel(%arg0: i32, %arg1: memref<2x4x8x128xf32, #tpu.memory_space<vmem>>, %arg2: memref<2x8x128xi32, #tpu.memory_space<vmem>>, %arg3: memref<1x8x128xf32, #tpu.memory_space<vmem>>) attributes {dimension_semantics = [#tpu.dimension_semantics<parallel>], iteration_bounds = array<i64: 1>, scalar_prefetch = 0 : i64, scratch_operands = 0 : i64, tpu.core_type = #tpu.core_type<tc>, window_params = [{transform_indices = @transform_0, window_bounds = array<i64: 2, 4, 8, 128>}, {transform_indices = @transform_1, window_bounds = array<i64: 2, 8, 128>}, {transform_indices = @transform_2, window_bounds = array<i64: 1, 8, 128>}]} {
    %c0 = arith.constant 0 : index
    %c0_0 = arith.constant 0 : index
    %c0_1 = arith.constant 0 : index
    %c0_2 = arith.constant 0 : index
    %0 = vector.load %arg1[%c0, %c0_0, %c0_1, %c0_2] : memref<2x4x8x128xf32, #tpu.memory_space<vmem>>, vector<2x4x8x128xf32>
    %c0_3 = arith.constant 0 : index
    %c0_4 = arith.constant 0 : index
    %c0_5 = arith.constant 0 : index
    %1 = vector.load %arg2[%c0_3, %c0_4, %c0_5] : memref<2x8x128xi32, #tpu.memory_space<vmem>>, vector<2x8x128xi32>
    %cst = arith.constant dense<0xFF800000> : vector<2x8x128xf32>
    %2 = vector.multi_reduction <maximumf>, %0, %cst [1] : vector<2x4x8x128xf32> to vector<2x8x128xf32>
    %cst_6 = arith.constant 0.000000e+00 : f32
    %3 = vector.broadcast %cst_6 : f32 to vector<2x8x128xf32>
    %cst_7 = arith.constant 0.000000e+00 : f32
    %4 = vector.broadcast %cst_7 : f32 to vector<2x8x128xf32>
    %5 = vector.extract_strided_slice %0 {offsets = [0, 0, 0, 0], sizes = [2, 1, 8, 128], strides = [1, 1, 1, 1]} : vector<2x4x8x128xf32> to vector<2x1x8x128xf32>
    %6 = vector.shape_cast %5 : vector<2x1x8x128xf32> to vector<2x8x128xf32>
    %7 = arith.subf %6, %2 : vector<2x8x128xf32>
    %8 = math.exp %7 : vector<2x8x128xf32>
    %9 = arith.addf %3, %8 : vector<2x8x128xf32>
    %c0_i32 = arith.constant 0 : i32
    %10 = vector.broadcast %c0_i32 : i32 to vector<2x8x128xi32>
    %11 = arith.cmpi eq, %1, %10 : vector<2x8x128xi32>
    %cst_8 = arith.constant 0.000000e+00 : f32
    %12 = vector.broadcast %cst_8 : f32 to vector<2x8x128xf32>
    %13 = arith.select %11, %6, %12 : vector<2x8x128xi1>, vector<2x8x128xf32>
    %14 = arith.addf %4, %13 : vector<2x8x128xf32>
    %15 = vector.extract_strided_slice %0 {offsets = [0, 1, 0, 0], sizes = [2, 1, 8, 128], strides = [1, 1, 1, 1]} : vector<2x4x8x128xf32> to vector<2x1x8x128xf32>
    %16 = vector.shape_cast %15 : vector<2x1x8x128xf32> to vector<2x8x128xf32>
    %17 = arith.subf %16, %2 : vector<2x8x128xf32>
    %18 = math.exp %17 : vector<2x8x128xf32>
    %19 = arith.addf %9, %18 : vector<2x8x128xf32>
    %c1_i32 = arith.constant 1 : i32
    %20 = vector.broadcast %c1_i32 : i32 to vector<2x8x128xi32>
    %21 = arith.cmpi eq, %1, %20 : vector<2x8x128xi32>
    %cst_9 = arith.constant 0.000000e+00 : f32
    %22 = vector.broadcast %cst_9 : f32 to vector<2x8x128xf32>
    %23 = arith.select %21, %16, %22 : vector<2x8x128xi1>, vector<2x8x128xf32>
    %24 = arith.addf %14, %23 : vector<2x8x128xf32>
    %25 = vector.extract_strided_slice %0 {offsets = [0, 2, 0, 0], sizes = [2, 1, 8, 128], strides = [1, 1, 1, 1]} : vector<2x4x8x128xf32> to vector<2x1x8x128xf32>
    %26 = vector.shape_cast %25 : vector<2x1x8x128xf32> to vector<2x8x128xf32>
    %27 = arith.subf %26, %2 : vector<2x8x128xf32>
    %28 = math.exp %27 : vector<2x8x128xf32>
    %29 = arith.addf %19, %28 : vector<2x8x128xf32>
    %c2_i32 = arith.constant 2 : i32
    %30 = vector.broadcast %c2_i32 : i32 to vector<2x8x128xi32>
    %31 = arith.cmpi eq, %1, %30 : vector<2x8x128xi32>
    %cst_10 = arith.constant 0.000000e+00 : f32
    %32 = vector.broadcast %cst_10 : f32 to vector<2x8x128xf32>
    %33 = arith.select %31, %26, %32 : vector<2x8x128xi1>, vector<2x8x128xf32>
    %34 = arith.addf %24, %33 : vector<2x8x128xf32>
    %35 = vector.extract_strided_slice %0 {offsets = [0, 3, 0, 0], sizes = [2, 1, 8, 128], strides = [1, 1, 1, 1]} : vector<2x4x8x128xf32> to vector<2x1x8x128xf32>
    %36 = vector.shape_cast %35 : vector<2x1x8x128xf32> to vector<2x8x128xf32>
    %37 = arith.subf %36, %2 : vector<2x8x128xf32>
    %38 = math.exp %37 : vector<2x8x128xf32>
    %39 = arith.addf %29, %38 : vector<2x8x128xf32>
    %c3_i32 = arith.constant 3 : i32
    %40 = vector.broadcast %c3_i32 : i32 to vector<2x8x128xi32>
    %41 = arith.cmpi eq, %1, %40 : vector<2x8x128xi32>
    %cst_11 = arith.constant 0.000000e+00 : f32
    %42 = vector.broadcast %cst_11 : f32 to vector<2x8x128xf32>
    %43 = arith.select %41, %36, %42 : vector<2x8x128xi1>, vector<2x8x128xf32>
    %44 = arith.addf %34, %43 : vector<2x8x128xf32>
    %45 = math.log %39 : vector<2x8x128xf32>
    %46 = arith.addf %2, %45 : vector<2x8x128xf32>
    %47 = arith.subf %46, %44 : vector<2x8x128xf32>
    %cst_12 = arith.constant 0.000000e+00 : f32
    %48 = vector.broadcast %cst_12 : f32 to vector<2x8x128xf32>
    %49 = arith.subf %48, %47 : vector<2x8x128xf32>
    %50 = math.exp %49 : vector<2x8x128xf32>
    %cst_13 = arith.constant 1.000000e+00 : f32
    %51 = vector.broadcast %cst_13 : f32 to vector<2x8x128xf32>
    %52 = arith.subf %51, %50 : vector<2x8x128xf32>
    %53 = arith.mulf %52, %52 : vector<2x8x128xf32>
    %cst_14 = arith.constant 1.000000e+00 : f32
    %54 = vector.broadcast %cst_14 : f32 to vector<2x8x128xf32>
    %55 = arith.mulf %54, %53 : vector<2x8x128xf32>
    %56 = arith.mulf %55, %47 : vector<2x8x128xf32>
    %c-100_i32 = arith.constant -100 : i32
    %57 = vector.broadcast %c-100_i32 : i32 to vector<2x8x128xi32>
    %58 = arith.cmpi ne, %1, %57 : vector<2x8x128xi32>
    %cst_15 = arith.constant 0.000000e+00 : f32
    %59 = vector.broadcast %cst_15 : f32 to vector<2x8x128xf32>
    %60 = arith.select %58, %56, %59 : vector<2x8x128xi1>, vector<2x8x128xf32>
    %cst_16 = arith.constant dense<0.000000e+00> : vector<8x128xf32>
    %61 = vector.multi_reduction <add>, %60, %cst_16 [0] : vector<2x8x128xf32> to vector<8x128xf32>
    %62 = vector.shape_cast %61 : vector<8x128xf32> to vector<1x8x128xf32>
    %cst_17 = arith.constant dense<0.000000e+00> : vector<8x128xf32>
    %63 = vector.multi_reduction <add>, %62, %cst_17 [0] : vector<1x8x128xf32> to vector<8x128xf32>
    %c0_18 = arith.constant 0 : index
    %c0_19 = arith.constant 0 : index
    %c0_20 = arith.constant 0 : index
    %64 = vector.load %arg3[%c0_18, %c0_19, %c0_20] : memref<1x8x128xf32, #tpu.memory_space<vmem>>, vector<1x8x128xf32>
    %65 = vector.shape_cast %64 : vector<1x8x128xf32> to vector<8x128xf32>
    %66 = vector.shape_cast %63 : vector<8x128xf32> to vector<1x8x128xf32>
    tpu.vector_store %arg3[%c0_18, %c0_19, %c0_20], %66 {strides = array<i32>} : memref<1x8x128xf32, #tpu.memory_space<vmem>>, vector<1x8x128xf32>,
    return
  }
  func.func @transform_0(%arg0: i32) -> (i32, i32, i32, i32) {
    %c0_i32 = arith.constant 0 : i32
    %c0_i32_0 = arith.constant 0 : i32
    %c0_i32_1 = arith.constant 0 : i32
    %c0_i32_2 = arith.constant 0 : i32
    return %c0_i32, %c0_i32_0, %arg0, %c0_i32_1 : i32, i32, i32, i32
  }
  func.func @transform_1(%arg0: i32) -> (i32, i32, i32) {
    %c0_i32 = arith.constant 0 : i32
    %c0_i32_0 = arith.constant 0 : i32
    %c0_i32_1 = arith.constant 0 : i32
    return %c0_i32, %arg0, %c0_i32_0 : i32, i32, i32
  }
  func.func @transform_2(%arg0: i32) -> (i32, i32, i32) {
    %c0_i32 = arith.constant 0 : i32
    %c0_i32_0 = arith.constant 0 : i32
    %c0_i32_1 = arith.constant 0 : i32
    return %arg0, %c0_i32, %c0_i32_0 : i32, i32, i32
  }
}

</mosaic_0001>

<llo_original>
// kernel: tpu_custom_call.1
$region0: #{tpu_custom_call.1}
  #allocation0 [shape = 'u32[]', space=smem, size = 0x4, offset = 0x4, fixed_abs, tag = 'smem constant byte address 0x4 - core index']
  #allocation1 [shape = 'u32[144,128]{1,0:T(1,128)}', space=vmem, size = 0x12000, scoped, tag = 'internal scratch']
  %s0 = inlined_call_operand.hbm [shape: f32[2,4,8,128], index: 0, kind: input, shape index: {}]
  %s1 = inlined_call_operand.hbm [shape: s32[2,8,128], index: 1, kind: input, shape index: {}]
  %s2 = inlined_call_operand.hbm [shape: f32[1,8,128], index: 2, kind: output, shape index: {}]
  %s3 = sld [smem:[#allocation0]]
  $region26: #{tpu_custom_call.1} parent=0
    _
  %s5 = ssub.s32 1, %s3
  %s6 = scalar_select 0, %s5, %s3
  $region1: #{tpu_custom_call.1} parent=0
    #allocation2 [shape = 'u8[32768]{0}', space=vmem, size = 0x8000, scoped, tag = 'input window, operand 0, single buffered']
    #allocation3 [shape = 's32[1]{0}', space=sflag, size = 0x4, scoped, tag = 'scoped memory for tpu_custom_call.1']
    #allocation4 [shape = 's32[1]{0}', space=sflag, size = 0x4, scoped, tag = 'scoped memory for tpu_custom_call.1']
    #allocation5 [shape = 'u8[8192]{0}', space=vmem, size = 0x2000, scoped, tag = 'input window, operand 1, single buffered']
    #allocation6 [shape = 's32[1]{0}', space=sflag, size = 0x4, scoped, tag = 'scoped memory for tpu_custom_call.1']
    #allocation7 [shape = 'u8[4096]{0}', space=vmem, size = 0x1000, scoped, tag = 'output window, operand 0, single buffered']
    %7 = vsyncpa [#allocation3], 0
    %8 = vsyncpa [#allocation6], 0
    %9 = vsyncpa [#allocation4], 0
    // Predicated region
    $region2: #{tpu_custom_call.1} parent=1 // pred_check
      _
    $region3: #{tpu_custom_call.1} parent=1 // pred_check_branch
      %11 = sbr.rel (0) target = $region5
    $region4: #{tpu_custom_call.1} parent=1 // pred_region
      %s13 = ssub.s32 1024, 1024
      %14 = vsyncadd [#allocation3], %s13
      %s15 = sshll.u32 [#allocation2], 4
      %s16 = int_to_ptr.vmem [resolvable:$true] %s15
      %21 = dma.hbm_to_vmem [thread:$0]  %s0, 1024, %s16, [#allocation3], 128, 128, 8
    $region5: #{tpu_custom_call.1} parent=1 // pred_fallthru
      _
    // Predicated region
    $region6: #{tpu_custom_call.1} parent=1 // pred_check
      _
    $region7: #{tpu_custom_call.1} parent=1 // pred_check_branch
      %23 = sbr.rel (0) target = $region9
    $region8: #{tpu_custom_call.1} parent=1 // pred_region
      %s25 = ssub.s32 256, 256
      %26 = vsyncadd [#allocation6], %s25
      %s27 = sshll.u32 [#allocation5], 4
      %s28 = int_to_ptr.vmem [resolvable:$true] %s27
      %33 = dma.hbm_to_vmem [thread:$0]  %s1, 256, %s28, [#allocation6], 128, 128, 8
    $region9: #{tpu_custom_call.1} parent=1 // pred_fallthru
      _
    // Predicated region
    $region10: #{tpu_custom_call.1} parent=1 // pred_check
      _
    $region11: #{tpu_custom_call.1} parent=1 // pred_check_branch
      %35 = sbr.rel (0) target = $region13
    $region12: #{tpu_custom_call.1} parent=1 // pred_region
      %36 = dma.done [#allocation3], 1024
    $region13: #{tpu_custom_call.1} parent=1 // pred_fallthru
      _
    // Predicated region
    $region14: #{tpu_custom_call.1} parent=1 // pred_check
      _
    $region15: #{tpu_custom_call.1} parent=1 // pred_check_branch
      %38 = sbr.rel (0) target = $region17
    $region16: #{tpu_custom_call.1} parent=1 // pred_region
      %39 = dma.done [#allocation6], 256
    $region17: #{tpu_custom_call.1} parent=1 // pred_fallthru
      _
    %v40 = vld [vmem:[#allocation2] sm:$0xff]
    %v41 = vld [vmem:[#allocation2 + $0x8] sm:$0xff]
    %v42 = vld [vmem:[#allocation2 + $0x10] sm:$0xff]
    %v43 = vld [vmem:[#allocation2 + $0x18] sm:$0xff]
    %v44 = vld [vmem:[#allocation2 + $0x20] sm:$0xff]
    %v45 = vld [vmem:[#allocation2 + $0x28] sm:$0xff]
    %v46 = vld [vmem:[#allocation2 + $0x30] sm:$0xff]
    %v47 = vld [vmem:[#allocation2 + $0x38] sm:$0xff]
    %v48 = vld [vmem:[#allocation5] sm:$0xff]
    %v49 = vld [vmem:[#allocation5 + $0x8] sm:$0xff]
    %v50 = vmax.f32 %v40, %v42
    %v51 = vmax.f32 %v41, %v43
    %v52 = vmax.f32 %v50, %v51
    %v53 = vmax.f32 %v44, %v46
    %v54 = vmax.f32 %v45, %v47
    %v55 = vmax.f32 %v53, %v54
    %v56 = vsub.f32 %v40, %v52
    %v57 = vsub.f32 %v44, %v55
    %v58 = vmul.f32 %v56, 1.442695
    %v59 = vpow.pop %v58
    %v60 = vmul.f32 %v57, 1.442695
    %v61 = vpow.pop %v60
    %v62 = vadd.f32 %v59, 0.0
    %v63 = vadd.f32 %v61, 0.0
    %vm64 = vcmp.eq.s32.totalorder %v48, 0
    %vm65 = vcmp.eq.s32.totalorder %v49, 0
    %v66 = vsel %vm64, %v40, 0.0
    %v67 = vsel %vm65, %v44, 0.0
    %v68 = vadd.f32 %v66, 0.0
    %v69 = vadd.f32 %v67, 0.0
    %v70 = vsub.f32 %v41, %v52
    %v71 = vsub.f32 %v45, %v55
    %v72 = vmul.f32 %v70, 1.442695
    %v73 = vpow.pop %v72
    %v74 = vmul.f32 %v71, 1.442695
    %v75 = vpow.pop %v74
    %v76 = vadd.f32 %v62, %v73
    %v77 = vadd.f32 %v63, %v75
    %vm78 = vcmp.eq.s32.totalorder %v48, 1
    %vm79 = vcmp.eq.s32.totalorder %v49, 1
    %v80 = vsel %vm78, %v41, 0.0
    %v81 = vsel %vm79, %v45, 0.0
    %v82 = vadd.f32 %v68, %v80
    %v83 = vadd.f32 %v69, %v81
    %v84 = vsub.f32 %v42, %v52
    %v85 = vsub.f32 %v46, %v55
    %v86 = vmul.f32 %v84, 1.442695
    %v87 = vpow.pop %v86
    %v88 = vmul.f32 %v85, 1.442695
    %v89 = vpow.pop %v88
    %v90 = vadd.f32 %v76, %v87
    %v91 = vadd.f32 %v77, %v89
    %vm92 = vcmp.eq.s32.totalorder %v48, 2
    %vm93 = vcmp.eq.s32.totalorder %v49, 2
    %v94 = vsel %vm92, %v42, 0.0
    %v95 = vsel %vm93, %v46, 0.0
    %v96 = vadd.f32 %v82, %v94
    %v97 = vadd.f32 %v83, %v95
    %v98 = vsub.f32 %v43, %v52
    %v99 = vsub.f32 %v47, %v55
    %v100 = vmul.f32 %v98, 1.442695
    %v101 = vpow.pop %v100
    %v102 = vmul.f32 %v99, 1.442695
    %v103 = vpow.pop %v102
    %v104 = vadd.f32 %v90, %v101
    %v105 = vadd.f32 %v91, %v103
    %vm106 = vcmp.eq.s32.totalorder %v48, 3
    %vm107 = vcmp.eq.s32.totalorder %v49, 3
    %v108 = vsel %vm106, %v43, 0.0
    %v109 = vsel %vm107, %v47, 0.0
    %v110 = vadd.f32 %v96, %v108
    %v111 = vadd.f32 %v97, %v109
    %v112 = vlog2.pop %v104
    %v113 = vmul.f32 %v112, 0.6931472
    %v114 = vlog2.pop %v105
    %v115 = vmul.f32 %v114, 0.6931472
    %v116 = vadd.f32 %v52, %v113
    %v117 = vadd.f32 %v55, %v115
    %v118 = vsub.f32 %v116, %v110
    %v119 = vsub.f32 %v117, %v111
    %v120 = vsub.f32 0.0, %v118
    %v121 = vsub.f32 0.0, %v119
    %v122 = vmul.f32 %v120, 1.442695
    %v123 = vpow.pop %v122
    %v124 = vmul.f32 %v121, 1.442695
    %v125 = vpow.pop %v124
    %v126 = vsub.f32 1.0, %v123
    %v127 = vsub.f32 1.0, %v125
    %v128 = vmul.f32 %v126, %v126
    %v129 = vmul.f32 %v127, %v127
    %v130 = vmul.f32 %v128, %v118
    %v131 = vmul.f32 %v129, %v119
    %vm132 = vcmp.ne.s32.totalorder %v48, 4294967196
    %vm133 = vcmp.ne.s32.totalorder %v49, 4294967196
    %v134 = vsel %vm132, %v130, 0.0
    %v135 = vsel %vm133, %v131, 0.0
    %v136 = vadd.f32 %v134, %v135
    %v137 = vadd.f32 %v136, 0.0
    %138 = vst [vmem:[#allocation7] sm:$0xff] %v137
    // Predicated region
    $region18: #{tpu_custom_call.1} parent=1 // pred_check
      _
    $region19: #{tpu_custom_call.1} parent=1 // pred_check_branch
      %140 = sbr.rel (0) target = $region21
    $region20: #{tpu_custom_call.1} parent=1 // pred_region
      %s142 = ssub.s32 128, 128
      %143 = vsyncadd [#allocation4], %s142
      %s145 = sshll.u32 [#allocation7], 4
      %s146 = int_to_ptr.vmem [resolvable:$true] %s145
      %148 = dma.vmem_to_hbm [thread:$0]  %s146, 128, %s2, [#allocation4]
    $region21: #{tpu_custom_call.1} parent=1 // pred_fallthru
      _
    // Predicated region
    $region22: #{tpu_custom_call.1} parent=1 // pred_check
      _
    $region23: #{tpu_custom_call.1} parent=1 // pred_check_branch
      %150 = sbr.rel (0) target = $region25
    $region24: #{tpu_custom_call.1} parent=1 // pred_region
      %151 = dma.done [#allocation4], 128
    $region25: #{tpu_custom_call.1} parent=1 // pred_fallthru
      _
    %152 = vsyncpa [#allocation3], 1
    %153 = vsyncpa [#allocation6], 1
    %154 = vsyncpa [#allocation4], 1

</llo_original>
